<compile_context>
chip_gen: v5e
topology: v5e:2x2
jax: 0.10.0
libtpu: 0.0.40
codegen_flags: <defaults>
</compile_context>

<pallas_src>
import functools

import jax
import jax.numpy as jnp
from jax.experimental import pallas as pl
from jax.experimental.pallas import tpu as pltpu

H_PAD = 128   # padded hidden width (fc1/fc2 = 64 real units + 1 ones-carrier)
A_PAD = 128   # padded output width (lane-dense stores)


def _round_up(x, m):
    return ((x + m - 1) // m) * m


def _mlp_kernel(x_ref, w1_ref, w2_ref, w3_ref, o_ref):
    # Biases are baked into the packed weights via the ones-carrier lane, so the
    # whole forward is just 3 MXU matmuls + 2 VPU ReLUs. f32 accumulation.
    x = x_ref[...]
    h1 = jnp.maximum(
        jnp.dot(x, w1_ref[...], preferred_element_type=jnp.float32), 0.0)
    h2 = jnp.maximum(
        jnp.dot(h1, w2_ref[...], preferred_element_type=jnp.float32), 0.0)
    o_ref[...] = jnp.dot(h2, w3_ref[...], preferred_element_type=jnp.float32)


def pack_params(w1, b1, w2, b2, w3, b3):
    """Pack PyTorch-style (in,out) weights + (out,) biases into lane-padded
    augmented matrices that carry the bias through a 'ones' lane.

    Layout:
      w1p: (state_size+1, H_PAD)  row `state_size`  = [b1, 1@col fc1, 0...]
      w2p: (H_PAD, H_PAD)         row `fc1_units`   = [b2, 1@col fc2, 0...]
      w3p: (H_PAD, A_PAD)         row `fc2_units`   = [b3, 0...]
    """
    state_size, fc1 = w1.shape
    _, fc2 = w2.shape
    _, action_size = w3.shape
    assert fc1 < H_PAD and fc2 < H_PAD and action_size <= A_PAD

    w1p = jnp.zeros((state_size + 1, H_PAD), jnp.float32)
    w1p = w1p.at[:state_size, :fc1].set(w1)
    w1p = w1p.at[state_size, :fc1].set(b1)
    w1p = w1p.at[state_size, fc1].set(1.0)      # propagate ones-carrier to h1

    w2p = jnp.zeros((H_PAD, H_PAD), jnp.float32)
    w2p = w2p.at[:fc1, :fc2].set(w2)
    w2p = w2p.at[fc1, :fc2].set(b2)
    w2p = w2p.at[fc1, fc2].set(1.0)             # propagate ones-carrier to h2

    w3p = jnp.zeros((H_PAD, A_PAD), jnp.float32)
    w3p = w3p.at[:fc2, :action_size].set(w3)
    w3p = w3p.at[fc2, :action_size].set(b3)

    return (w1p, w2p, w3p), action_size


@functools.partial(jax.jit, static_argnums=(2,))
def net_forward(state, packed, action_size):
    """Forward pass of Net: fc3(relu(fc2(relu(fc1(state)))))."""
    w1p, w2p, w3p = packed
    B, state_size = state.shape
    s_aug = w1p.shape[0]                       # state_size + 1

    # Batch tiling: 128-row blocks for training batches, single padded block
    # for tiny inference batches.
    tb = 128 if B >= 128 else _round_up(B, 8)
    b_pad = _round_up(B, tb)

    # Append the ones-carrier lane (bias) and pad the batch to the block size.
    x_aug = jnp.concatenate([state, jnp.ones((B, 1), state.dtype)], axis=1)
    if b_pad != B:
        x_aug = jnp.pad(x_aug, ((0, b_pad - B), (0, 0)))

    grid = (b_pad // tb,)

    flops = 2 * b_pad * (s_aug * H_PAD + H_PAD * H_PAD + H_PAD * A_PAD)
    bytes_accessed = 4 * (
        b_pad * s_aug                                   # x
        + s_aug * H_PAD + H_PAD * H_PAD + H_PAD * A_PAD  # weights
        + b_pad * A_PAD)                                 # output

    out = pl.pallas_call(
        _mlp_kernel,
        out_shape=jax.ShapeDtypeStruct((b_pad, A_PAD), jnp.float32),
        grid=grid,
        in_specs=[
            pl.BlockSpec((tb, s_aug), lambda i: (i, 0)),      # batch-tiled x
            pl.BlockSpec(w1p.shape, lambda i: (0, 0)),        # resident weights
            pl.BlockSpec(w2p.shape, lambda i: (0, 0)),
            pl.BlockSpec(w3p.shape, lambda i: (0, 0)),
        ],
        out_specs=pl.BlockSpec((tb, A_PAD), lambda i: (i, 0)),
        compiler_params=pltpu.CompilerParams(
            dimension_semantics=("parallel",)),               # 2 TCs on v7x
        cost_estimate=pl.CostEstimate(
            flops=flops, transcendentals=0, bytes_accessed=bytes_accessed),
    )(x_aug, w1p, w2p, w3p)

    return out[:B, :action_size]


def init_params(key, state_size, action_size, fc1_units=64, fc2_units=64):
    """PyTorch nn.Linear default init (uniform +/- 1/sqrt(fan_in))."""
    keys = jax.random.split(key, 6)

    def linear(kw, kb, fan_in, fan_out):
        bound = 1.0 / jnp.sqrt(float(fan_in))
        w = jax.random.uniform(kw, (fan_in, fan_out), jnp.float32, -bound, bound)
        b = jax.random.uniform(kb, (fan_out,), jnp.float32, -bound, bound)
        return w, b

    w1, b1 = linear(keys[0], keys[1], state_size, fc1_units)
    w2, b2 = linear(keys[2], keys[3], fc1_units, fc2_units)
    w3, b3 = linear(keys[4], keys[5], fc2_units, action_size)
    return (w1, b1, w2, b2, w3, b3)


if __name__ == "__main__":
    # Small shapes consistent with the DQN use case.
    batch = 8
    state_size = 8
    action_size = 4

    key = jax.random.PRNGKey(0)
    k_params, k_state = jax.random.split(key)

    raw = init_params(k_params, state_size, action_size)
    packed, a_sz = pack_params(*raw)
    state = jax.random.normal(k_state, (batch, state_size), dtype=jnp.float32)

    out = net_forward(state, packed, a_sz)
    out = jax.block_until_ready(out)

    # Reference check in plain JAX using the unpacked parameters.
    w1, b1, w2, b2, w3, b3 = raw
    h1 = jnp.maximum(state @ w1 + b1, 0.0)
    h2 = jnp.maximum(h1 @ w2 + b2, 0.0)
    ref = h2 @ w3 + b3
    assert out.shape == (batch, action_size)
    assert jnp.allclose(out, ref, atol=1e-5, rtol=1e-5)

    # Also exercise a training-sized batch path (grid > 1, 128-row blocks).
    big = jax.random.normal(jax.random.PRNGKey(1), (300, state_size), jnp.float32)
    big_out = jax.block_until_ready(net_forward(big, packed, a_sz))
    bh1 = jnp.maximum(big @ w1 + b1, 0.0)
    bh2 = jnp.maximum(bh1 @ w2 + b2, 0.0)
    big_ref = bh2 @ w3 + b3
    assert big_out.shape == (300, action_size)
    assert jnp.allclose(big_out, big_ref, atol=1e-4, rtol=1e-4)

    print("KERNEL_OK")
</pallas_src>

<mosaic_0001>
module attributes {stable_mosaic.version = 11 : i64} {
  func.func @_mlp_kernel(%arg0: i32, %arg1: memref<8x9xf32, #tpu.memory_space<vmem>>, %arg2: memref<9x128xf32, #tpu.memory_space<vmem>>, %arg3: memref<128x128xf32, #tpu.memory_space<vmem>>, %arg4: memref<128x128xf32, #tpu.memory_space<vmem>>, %arg5: memref<8x128xf32, #tpu.memory_space<vmem>>) attributes {dimension_semantics = [#tpu.dimension_semantics<parallel>], iteration_bounds = array<i64: 1>, scalar_prefetch = 0 : i64, scratch_operands = 0 : i64, tpu.core_type = #tpu.core_type<tc>, window_params = [{transform_indices = @transform_0, window_bounds = array<i64: 8, 9>}, {pipeline_mode = #tpu.pipeline_mode<synchronous>, transform_indices = @transform_1, window_bounds = array<i64: 9, 128>}, {pipeline_mode = #tpu.pipeline_mode<synchronous>, transform_indices = @transform_2, window_bounds = array<i64: 128, 128>}, {pipeline_mode = #tpu.pipeline_mode<synchronous>, transform_indices = @transform_3, window_bounds = array<i64: 128, 128>}, {transform_indices = @transform_4, window_bounds = array<i64: 8, 128>}]} {
    %c0 = arith.constant 0 : index
    %c0_0 = arith.constant 0 : index
    %0 = vector.load %arg1[%c0, %c0_0] : memref<8x9xf32, #tpu.memory_space<vmem>>, vector<8x9xf32>
    %c0_1 = arith.constant 0 : index
    %c0_2 = arith.constant 0 : index
    %1 = vector.load %arg2[%c0_1, %c0_2] : memref<9x128xf32, #tpu.memory_space<vmem>>, vector<9x128xf32>
    %cst = arith.constant dense<0.000000e+00> : vector<8x128xf32>
    %2 = tpu.matmul %0, %1, %cst {dimension_numbers = #tpu.dot_dimension_numbers<[1], [0], [0], [1], [0, 0, 1, 1], [], []>} : vector<8x9xf32>, vector<9x128xf32>, vector<8x128xf32> -> vector<8x128xf32>
    %cst_3 = arith.constant 0.000000e+00 : f32
    %3 = vector.broadcast %cst_3 : f32 to vector<8x128xf32>
    %4 = arith.maximumf %2, %3 : vector<8x128xf32>
    %c0_4 = arith.constant 0 : index
    %c0_5 = arith.constant 0 : index
    %5 = vector.load %arg3[%c0_4, %c0_5] : memref<128x128xf32, #tpu.memory_space<vmem>>, vector<128x128xf32>
    %cst_6 = arith.constant dense<0.000000e+00> : vector<8x128xf32>
    %6 = tpu.matmul %4, %5, %cst_6 {dimension_numbers = #tpu.dot_dimension_numbers<[1], [0], [0], [1], [0, 0, 1, 1], [], []>} : vector<8x128xf32>, vector<128x128xf32>, vector<8x128xf32> -> vector<8x128xf32>
    %cst_7 = arith.constant 0.000000e+00 : f32
    %7 = vector.broadcast %cst_7 : f32 to vector<8x128xf32>
    %8 = arith.maximumf %6, %7 : vector<8x128xf32>
    %c0_8 = arith.constant 0 : index
    %c0_9 = arith.constant 0 : index
    %9 = vector.load %arg4[%c0_8, %c0_9] : memref<128x128xf32, #tpu.memory_space<vmem>>, vector<128x128xf32>
    %cst_10 = arith.constant dense<0.000000e+00> : vector<8x128xf32>
    %10 = tpu.matmul %8, %9, %cst_10 {dimension_numbers = #tpu.dot_dimension_numbers<[1], [0], [0], [1], [0, 0, 1, 1], [], []>} : vector<8x128xf32>, vector<128x128xf32>, vector<8x128xf32> -> vector<8x128xf32>
    %c0_11 = arith.constant 0 : index
    %c0_12 = arith.constant 0 : index
    %11 = vector.load %arg5[%c0_11, %c0_12] : memref<8x128xf32, #tpu.memory_space<vmem>>, vector<8x128xf32>
    tpu.vector_store %arg5[%c0_11, %c0_12], %10 {strides = array<i32>} : memref<8x128xf32, #tpu.memory_space<vmem>>, vector<8x128xf32>,
    return
  }
  func.func @transform_0(%arg0: i32) -> (i32, i32) {
    %c0_i32 = arith.constant 0 : i32
    %c0_i32_0 = arith.constant 0 : i32
    return %arg0, %c0_i32 : i32, i32
  }
  func.func @transform_1(%arg0: i32) -> (i32, i32) {
    %c0_i32 = arith.constant 0 : i32
    %c0_i32_0 = arith.constant 0 : i32
    %c0_i32_1 = arith.constant 0 : i32
    return %c0_i32, %c0_i32_0 : i32, i32
  }
  func.func @transform_2(%arg0: i32) -> (i32, i32) {
    %c0_i32 = arith.constant 0 : i32
    %c0_i32_0 = arith.constant 0 : i32
    %c0_i32_1 = arith.constant 0 : i32
    return %c0_i32, %c0_i32_0 : i32, i32
  }
  func.func @transform_3(%arg0: i32) -> (i32, i32) {
    %c0_i32 = arith.constant 0 : i32
    %c0_i32_0 = arith.constant 0 : i32
    %c0_i32_1 = arith.constant 0 : i32
    return %c0_i32, %c0_i32_0 : i32, i32
  }
  func.func @transform_4(%arg0: i32) -> (i32, i32) {
    %c0_i32 = arith.constant 0 : i32
    %c0_i32_0 = arith.constant 0 : i32
    return %arg0, %c0_i32 : i32, i32
  }
}

</mosaic_0001>

<llo_original>
// kernel: net_forward.1
$region0: #{net_forward.1}
  #allocation0 [shape = 'u32[]', space=smem, size = 0x4, offset = 0x4, fixed_abs, tag = 'smem constant byte address 0x4 - core index']
  #allocation1 [shape = 'u32[72,128]{1,0:T(1,128)}', space=vmem, size = 0x9000, scoped, tag = 'internal scratch']
  %s0 = inlined_call_operand.vmem [shape: f32[8,9], index: 0, kind: input, shape index: {}]
  %s1 = inlined_call_operand.vmem [shape: f32[9,128], index: 1, kind: input, shape index: {}]
  %s2 = inlined_call_operand.hbm [shape: f32[128,128], index: 2, kind: input, shape index: {}]
  %s3 = inlined_call_operand.hbm [shape: f32[128,128], index: 3, kind: input, shape index: {}]
  %s4 = inlined_call_operand.vmem [shape: f32[8,128], index: 4, kind: output, shape index: {}]
  %s5 = sld [smem:[#allocation0]]
  $region34: #{net_forward.1} parent=0
    _
  %s7 = ssub.s32 1, %s5
  %s8 = scalar_select 0, %s7, %s5
  $region1: #{net_forward.1} parent=0
    #allocation2 [shape = 'u8[65536]{0}', space=vmem, size = 0x10000, scoped, tag = 'input window, operand 2, single buffered']
    #allocation3 [shape = 's32[1]{0}', space=sflag, size = 0x4, scoped, tag = 'scoped memory for net_forward.1']
    #allocation4 [shape = 'u8[65536]{0}', space=vmem, size = 0x10000, scoped, tag = 'input window, operand 3, single buffered']
    #allocation5 [shape = 's32[1]{0}', space=sflag, size = 0x4, scoped, tag = 'scoped memory for net_forward.1']
    %9 = vsyncpa [#allocation3], 0
    %10 = vsyncpa [#allocation5], 0
    // Predicated region
    $region2: #{net_forward.1} parent=1 // pred_check
      _
    $region3: #{net_forward.1} parent=1 // pred_check_branch
      %12 = sbr.rel (0) target = $region5
    $region4: #{net_forward.1} parent=1 // pred_region
      _
    $region5: #{net_forward.1} parent=1 // pred_fallthru
      _
    // Predicated region
    $region6: #{net_forward.1} parent=1 // pred_check
      _
    $region7: #{net_forward.1} parent=1 // pred_check_branch
      %14 = sbr.rel (0) target = $region9
    $region8: #{net_forward.1} parent=1 // pred_region
      _
    $region9: #{net_forward.1} parent=1 // pred_fallthru
      _
    // Predicated region
    $region10: #{net_forward.1} parent=1 // pred_check
      _
    $region11: #{net_forward.1} parent=1 // pred_check_branch
      %16 = sbr.rel (0) target = $region13
    $region12: #{net_forward.1} parent=1 // pred_region
      %18 = vsyncadd [#allocation3], 0
      %s19 = sshll.u32 %s2, 4
      %s20 = int_to_ptr.hbm [resolvable:$true] %s19
      %s21 = sshll.u32 [#allocation2], 4
      %s22 = int_to_ptr.vmem [resolvable:$true] %s21
      %27 = dma.hbm_to_vmem [thread:$0]  %s20, 2048, %s22, [#allocation3], 128, 128, 8
    $region13: #{net_forward.1} parent=1 // pred_fallthru
      _
    // Predicated region
    $region14: #{net_forward.1} parent=1 // pred_check
      _
    $region15: #{net_forward.1} parent=1 // pred_check_branch
      %29 = sbr.rel (0) target = $region17
    $region16: #{net_forward.1} parent=1 // pred_region
      %31 = vsyncadd [#allocation5], 0
      %s32 = sshll.u32 %s3, 4
      %s33 = int_to_ptr.hbm [resolvable:$true] %s32
      %s34 = sshll.u32 [#allocation4], 4
      %s35 = int_to_ptr.vmem [resolvable:$true] %s34
      %40 = dma.hbm_to_vmem [thread:$0]  %s33, 2048, %s35, [#allocation5], 128, 128, 8
    $region17: #{net_forward.1} parent=1 // pred_fallthru
      _
    // Predicated region
    $region18: #{net_forward.1} parent=1 // pred_check
      _
    $region19: #{net_forward.1} parent=1 // pred_check_branch
      %42 = sbr.rel (0) target = $region21
    $region20: #{net_forward.1} parent=1 // pred_region
      %44 = dma.done [#allocation3], 2048
    $region21: #{net_forward.1} parent=1 // pred_fallthru
      _
    // Predicated region
    $region22: #{net_forward.1} parent=1 // pred_check
      _
    $region23: #{net_forward.1} parent=1 // pred_check_branch
      %46 = sbr.rel (0) target = $region25
    $region24: #{net_forward.1} parent=1 // pred_region
      %48 = dma.done [#allocation5], 2048
    $region25: #{net_forward.1} parent=1 // pred_fallthru
      _
    %v49 = vld [vmem:[%s0] sm:$0xff]
    %v50 = vld [vmem:[%s1] sm:$0xff]
    %v51 = vld [vmem:[%s1 + $0x8] sm:$0x1]
    %vm52 = vcmask 72704
    %v54 = vsel %vm52, %v49, 0
    %vm56 = vcmask 1040384
    %v58 = vsel %vm56, %v51, 0
    %60 = vmatpush.msra.mxu0 0.0
    %61 = vmatpush.msra.mxu0 0.0
    %62 = vmatpush.msra.mxu0 0.0
    %63 = vmatpush.msra.mxu0 0.0
    %64 = vmatpush.msra.mxu0 0.0
    %65 = vmatpush.msra.mxu0 0.0
    %66 = vmatpush.msra.mxu0 0.0
    %67 = vmatpush.msra.mxu0 0.0
    %68 = vmatpush.msra.mxu0 0.0
    %69 = vmatpush.msra.mxu0 0.0
    %70 = vmatpush.msra.mxu0 0.0
    %71 = vmatpush.msra.mxu0 0.0
    %72 = vmatpush.msra.mxu0 0.0
    %73 = vmatpush.msra.mxu0 0.0
    %74 = vmatpush.msra.mxu0 %v58
    %75 = vmatpush.msra.mxu0 %v50
    %76 = vmatmul.f32.gmra.mxu0 %v54
    %v77 = vpop.f32.mrf.mxu0
    %v78 = vadd.f32 0.0, %v77
    %79 = vdwg.mxu0
    %v80 = vmax.f32 %v78, 0.0
    %v81 = vld [vmem:[#allocation2] sm:$0xff]
    %v82 = vld [vmem:[#allocation2 + $0x8] sm:$0xff]
    %v83 = vld [vmem:[#allocation2 + $0x10] sm:$0xff]
    %v84 = vld [vmem:[#allocation2 + $0x18] sm:$0xff]
    %v85 = vld [vmem:[#allocation2 + $0x20] sm:$0xff]
    %v86 = vld [vmem:[#allocation2 + $0x28] sm:$0xff]
    %v87 = vld [vmem:[#allocation2 + $0x30] sm:$0xff]
    %v88 = vld [vmem:[#allocation2 + $0x38] sm:$0xff]
    %v89 = vld [vmem:[#allocation2 + $0x40] sm:$0xff]
    %v90 = vld [vmem:[#allocation2 + $0x48] sm:$0xff]
    %v91 = vld [vmem:[#allocation2 + $0x50] sm:$0xff]
    %v92 = vld [vmem:[#allocation2 + $0x58] sm:$0xff]
    %v93 = vld [vmem:[#allocation2 + $0x60] sm:$0xff]
    %v94 = vld [vmem:[#allocation2 + $0x68] sm:$0xff]
    %v95 = vld [vmem:[#allocation2 + $0x70] sm:$0xff]
    %v96 = vld [vmem:[#allocation2 + $0x78] sm:$0xff]
    %97 = vmatpush.msra.mxu0 %v96
    %98 = vmatpush.msra.mxu0 %v95
    %99 = vmatpush.msra.mxu0 %v94
    %100 = vmatpush.msra.mxu0 %v93
    %101 = vmatpush.msra.mxu0 %v92
    %102 = vmatpush.msra.mxu0 %v91
    %103 = vmatpush.msra.mxu0 %v90
    %104 = vmatpush.msra.mxu0 %v89
    %105 = vmatpush.msra.mxu0 %v88
    %106 = vmatpush.msra.mxu0 %v87
    %107 = vmatpush.msra.mxu0 %v86
    %108 = vmatpush.msra.mxu0 %v85
    %109 = vmatpush.msra.mxu0 %v84
    %110 = vmatpush.msra.mxu0 %v83
    %111 = vmatpush.msra.mxu0 %v82
    %112 = vmatpush.msra.mxu0 %v81
    %113 = vmatmul.f32.gmra.mxu0 %v80
    %v114 = vpop.f32.mrf.mxu0
    %v115 = vadd.f32 0.0, %v114
    %116 = vdwg.mxu0
    %v117 = vmax.f32 %v115, 0.0
    %v118 = vld [vmem:[#allocation4] sm:$0xff]
    %v119 = vld [vmem:[#allocation4 + $0x8] sm:$0xff]
    %v120 = vld [vmem:[#allocation4 + $0x10] sm:$0xff]
    %v121 = vld [vmem:[#allocation4 + $0x18] sm:$0xff]
    %v122 = vld [vmem:[#allocation4 + $0x20] sm:$0xff]
    %v123 = vld [vmem:[#allocation4 + $0x28] sm:$0xff]
    %v124 = vld [vmem:[#allocation4 + $0x30] sm:$0xff]
    %v125 = vld [vmem:[#allocation4 + $0x38] sm:$0xff]
    %v126 = vld [vmem:[#allocation4 + $0x40] sm:$0xff]
    %v127 = vld [vmem:[#allocation4 + $0x48] sm:$0xff]
    %v128 = vld [vmem:[#allocation4 + $0x50] sm:$0xff]
    %v129 = vld [vmem:[#allocation4 + $0x58] sm:$0xff]
    %v130 = vld [vmem:[#allocation4 + $0x60] sm:$0xff]
    %v131 = vld [vmem:[#allocation4 + $0x68] sm:$0xff]
    %v132 = vld [vmem:[#allocation4 + $0x70] sm:$0xff]
    %v133 = vld [vmem:[#allocation4 + $0x78] sm:$0xff]
    %134 = vmatpush.msra.mxu0 %v133
    %135 = vmatpush.msra.mxu0 %v132
    %136 = vmatpush.msra.mxu0 %v131
    %137 = vmatpush.msra.mxu0 %v130
    %138 = vmatpush.msra.mxu0 %v129
    %139 = vmatpush.msra.mxu0 %v128
    %140 = vmatpush.msra.mxu0 %v127
    %141 = vmatpush.msra.mxu0 %v126
    %142 = vmatpush.msra.mxu0 %v125
    %143 = vmatpush.msra.mxu0 %v124
    %144 = vmatpush.msra.mxu0 %v123
    %145 = vmatpush.msra.mxu0 %v122
    %146 = vmatpush.msra.mxu0 %v121
    %147 = vmatpush.msra.mxu0 %v120
    %148 = vmatpush.msra.mxu0 %v119
    %149 = vmatpush.msra.mxu0 %v118
    %150 = vmatmul.f32.gmra.mxu0 %v117
    %v151 = vpop.f32.mrf.mxu0
    %v152 = vadd.f32 0.0, %v151
    %153 = vdwg.mxu0
    %154 = vst [vmem:[%s4] sm:$0xff] %v152
    // Predicated region
    $region26: #{net_forward.1} parent=1 // pred_check
      _
    $region27: #{net_forward.1} parent=1 // pred_check_branch
      %156 = sbr.rel (0) target = $region29
    $region28: #{net_forward.1} parent=1 // pred_region
      _
    $region29: #{net_forward.1} parent=1 // pred_fallthru
      _
    // Predicated region
    $region30: #{net_forward.1} parent=1 // pred_check
      _
    $region31: #{net_forward.1} parent=1 // pred_check_branch
      %158 = sbr.rel (0) target = $region33
    $region32: #{net_forward.1} parent=1 // pred_region
      _
    $region33: #{net_forward.1} parent=1 // pred_fallthru
      _
    %159 = vsyncpa [#allocation3], 1
    %160 = vsyncpa [#allocation5], 1

</llo_original>
